<compile_context>
chip_gen: v7x
topology: tpu7x:2x2x1
jax: 0.10.0
libtpu: 0.0.40
codegen_flags: <defaults>
</compile_context>

<pallas_src>
from functools import partial

import jax
import jax.numpy as jnp
from jax import lax
from jax.experimental import pallas as pl
from jax.experimental.pallas import tpu as pltpu

# ---- GeneratorLoss config (module defaults) ----
KERNEL_SIZE = 5          # FilterLow: AvgPool2d(kernel_size=5, stride=1, padding=0)
W_COL = 1.0
W_TEX = 0.005
W_PER = 0.01             # unused here (perceptual loss omitted, see TODO above)
EPS = 1e-8


def _color_kernel(x_ref, y_ref, col_ref, *, nc_total, ho, wo, strip_rows, num_strips):
    """Per-block partial sum of |5x5 sum-pool(x - y)| over valid output pixels."""
    i = pl.program_id(0)
    tile_nc, _h, w = x_ref.shape
    k = KERNEL_SIZE

    # Hoisted masks (JAX does not CSE broadcast_in_dim; keep them out of the loop).
    nc_valid = (i * tile_nc
                + lax.broadcasted_iota(jnp.int32, (tile_nc, 1, 1), 0)) < nc_total
    use_lane_roll = (w % 128 == 0)
    if use_lane_roll:
        col_valid = lax.broadcasted_iota(jnp.int32, (1, 1, w), 2) < wo
        base_mask = nc_valid & col_valid          # (tile_nc, 1, w)
    else:
        base_mask = nc_valid                      # (tile_nc, 1, 1)

    def strip_partial(r0):
        # First output row this strip owns is r0; clamp the read window so the
        # (strip_rows + k - 1)-row footprint stays inside the block (last strip only).
        start = jnp.minimum(r0, ho - strip_rows)

        # ---- row (sublane) pass: 5 shifted *ref* reads (address offsets, no copies)
        rsum = (x_ref[:, pl.ds(start, strip_rows), :].astype(jnp.float32)
                - y_ref[:, pl.ds(start, strip_rows), :].astype(jnp.float32))
        for di in range(1, k):
            rsum = rsum + (
                x_ref[:, pl.ds(start + di, strip_rows), :].astype(jnp.float32)
                - y_ref[:, pl.ds(start + di, strip_rows), :].astype(jnp.float32))

        # ---- column (lane) pass
        if use_lane_roll:
            # positive shift (w - dj) == roll by -dj; wrap-around cols are masked off
            acc = rsum
            for dj in range(1, k):
                acc = acc + pltpu.roll(rsum, w - dj, axis=2)
        else:
            # ragged width: fall back to (slower) unaligned value slices
            acc = rsum[:, :, 0:wo]
            for dj in range(1, k):
                acc = acc + rsum[:, :, dj:dj + wo]

        # ---- validity: rows owned by this strip and inside [0, ho); valid nc rows
        r_abs = start + lax.broadcasted_iota(jnp.int32, (1, strip_rows, 1), 1)
        row_valid = (r_abs >= r0) & (r_abs < jnp.minimum(r0 + strip_rows, ho))
        mask = base_mask & row_valid
        return jnp.sum(jnp.where(mask, jnp.abs(acc), 0.0))

    if num_strips == 1:
        total = strip_partial(jnp.int32(0))
    else:
        total = lax.fori_loop(
            0, num_strips,
            lambda s, carry: carry + strip_partial(s * strip_rows),
            jnp.float32(0.0),
            unroll=num_strips <= 8)

    # lane-dense per-block partial; tiny wrapper-side reduce across blocks
    col_ref[...] = jnp.broadcast_to(total, col_ref.shape)


@partial(jax.jit, static_argnames=("tile_nc", "strip_rows"))
def generator_loss_pallas(tex_labels, out_images, target_images, *,
                          tile_nc=None, strip_rows=None):
    n, c, h, w = out_images.shape
    if h < KERNEL_SIZE or w < KERNEL_SIZE:
        raise ValueError("images must be at least KERNEL_SIZE x KERNEL_SIZE")
    nc = n * c
    ho = h - KERNEL_SIZE + 1
    wo = w - KERNEL_SIZE + 1

    # Inputs stay in native dtype through the pallas_call; cast after the DMA.
    x3 = out_images.reshape(nc, h, w)
    y3 = target_images.reshape(nc, h, w)
    itemsize = jnp.dtype(out_images.dtype).itemsize

    # ---- generation-aware VMEM budget (v5e/v6e: 128 MiB, v7x: 64 MiB per TC) ----
    try:
        vmem_cap = int(pltpu.get_tpu_info().vmem_capacity_bytes)
    except Exception:  # conservative fallback if the query is unavailable
        vmem_cap = 64 << 20
    vmem_limit = max(32 << 20, min(96 << 20, (vmem_cap * 3) // 4))
    block_budget = max(1 << 20, vmem_limit // 16)   # per-input block, native dtype

    if tile_nc is None:
        tile_nc = max(1, block_budget // (h * w * itemsize))
        if nc >= 2:
            # keep >= 2 grid blocks so both TensorCores get work on v7x
            tile_nc = min(tile_nc, pl.cdiv(nc, 2))
    tile_nc = max(1, min(int(tile_nc), nc))
    num_blocks = pl.cdiv(nc, tile_nc)

    if strip_rows is None:
        strip_rows = 64
    strip_rows = max(1, min(int(strip_rows), ho))
    num_strips = pl.cdiv(ho, strip_rows)

    # NOTE: W maps to lanes; widths that are multiples of 128 take the rolled
    # (copy-free) column pass. Other widths use a slower in-kernel slice fallback.
    cost = pl.CostEstimate(
        flops=int(12 * nc * h * w),
        transcendentals=0,
        bytes_accessed=int(2 * nc * h * w * itemsize + num_blocks * 8 * 128 * 4),
    )

    kernel = partial(_color_kernel, nc_total=nc, ho=ho, wo=wo,
                     strip_rows=strip_rows, num_strips=num_strips)

    col_parts = pl.pallas_call(
        kernel,
        grid=(num_blocks,),
        in_specs=[
            pl.BlockSpec((tile_nc, h, w), lambda i: (i, 0, 0)),
            pl.BlockSpec((tile_nc, h, w), lambda i: (i, 0, 0)),
        ],
        out_specs=pl.BlockSpec((1, 8, 128), lambda i: (i, 0, 0)),
        out_shape=jax.ShapeDtypeStruct((num_blocks, 8, 128), jnp.float32),
        compiler_params=pltpu.CompilerParams(
            dimension_semantics=("parallel",),
            vmem_limit_bytes=int(vmem_limit),
        ),
        cost_estimate=cost,
    )(x3, y3)

    # Tiny epilogue: reduce per-block partials; texture (adversarial) term on the
    # tiny labels tensor stays in plain jnp (no kernel DMA for it).
    col_sum = jnp.sum(col_parts[:, 0, 0])
    col_loss = col_sum / (float(KERNEL_SIZE * KERNEL_SIZE) * nc * ho * wo)
    tex_loss = jnp.mean(-jnp.log(tex_labels.astype(jnp.float32) + EPS))
    return W_COL * col_loss + W_TEX * tex_loss


def _generator_loss_ref(tex_labels, x, y):
    """Pure-JAX reference mirroring the PyTorch module (no perceptual loss)."""
    tex = jnp.mean(-jnp.log(tex_labels.astype(jnp.float32) + EPS))

    def pool(img):
        s = jax.lax.reduce_window(
            img.astype(jnp.float32), 0.0, jax.lax.add,
            window_dimensions=(1, 1, KERNEL_SIZE, KERNEL_SIZE),
            window_strides=(1, 1, 1, 1), padding="VALID")
        return s / (KERNEL_SIZE * KERNEL_SIZE)

    col = jnp.mean(jnp.abs(pool(x) - pool(y)))
    return W_COL * col + W_TEX * tex


if __name__ == "__main__":
    key = jax.random.PRNGKey(0)
    k1, k2, k3 = jax.random.split(key, 3)

    # tex_labels: discriminator probabilities in (0, 1); images: NCHW.
    tex_labels = jax.nn.sigmoid(jax.random.normal(k1, (2, 1, 16, 16), jnp.float32))

    # lane-dense width (multiple of 128) -> rolled (copy-free) column pass
    out_images = jax.random.normal(k2, (2, 3, 16, 128), jnp.float32)
    target_images = jax.random.normal(k3, (2, 3, 16, 128), jnp.float32)
    ref = _generator_loss_ref(tex_labels, out_images, target_images)

    loss = generator_loss_pallas(tex_labels, out_images, target_images)
    jax.block_until_ready(loss)
    assert jnp.allclose(loss, ref, rtol=1e-4, atol=1e-6), (float(loss), float(ref))

    # forced small tiles: multi-block grid, ragged last NC block (6 % 4 != 0) and
    # the multi-strip H loop (ho=12, strip=8) with its clamped last strip.
    loss2 = generator_loss_pallas(tex_labels, out_images, target_images,
                                  tile_nc=4, strip_rows=8)
    jax.block_until_ready(loss2)
    assert jnp.allclose(loss2, ref, rtol=1e-4, atol=1e-6), (float(loss2), float(ref))

    # ragged width (w % 128 != 0): exercises the slice-fallback column pass.
    out_small = jax.random.normal(k2, (2, 3, 16, 16), jnp.float32)
    tgt_small = jax.random.normal(k3, (2, 3, 16, 16), jnp.float32)
    ref_small = _generator_loss_ref(tex_labels, out_small, tgt_small)
    loss3 = generator_loss_pallas(tex_labels, out_small, tgt_small)
    jax.block_until_ready(loss3)
    assert jnp.allclose(loss3, ref_small, rtol=1e-4, atol=1e-6), (
        float(loss3), float(ref_small))

    print("KERNEL_OK")
</pallas_src>

<mosaic_0001>
module attributes {stable_mosaic.version = 11 : i64} {
  func.func @_color_kernel(%arg0: i32, %arg1: memref<3x16x128xf32, #tpu.memory_space<vmem>>, %arg2: memref<3x16x128xf32, #tpu.memory_space<vmem>>, %arg3: memref<1x8x128xf32, #tpu.memory_space<vmem>>) attributes {dimension_semantics = [#tpu.dimension_semantics<parallel>], iteration_bounds = array<i64: 2>, scalar_prefetch = 0 : i64, scratch_operands = 0 : i64, tpu.core_type = #tpu.core_type<tc>, window_params = [{transform_indices = @transform_0, window_bounds = array<i64: 3, 16, 128>}, {transform_indices = @transform_1, window_bounds = array<i64: 3, 16, 128>}, {transform_indices = @transform_2, window_bounds = array<i64: 1, 8, 128>}]} {
    %c3_i32 = arith.constant 3 : i32
    %0 = arith.muli %arg0, %c3_i32 : i32
    %1 = tpu.iota {dimensions = array<i32: 0>} : vector<3x1x1xi32>
    %2 = vector.broadcast %0 : i32 to vector<3x1x1xi32>
    %3 = arith.addi %2, %1 : vector<3x1x1xi32>
    %c6_i32 = arith.constant 6 : i32
    %4 = vector.broadcast %c6_i32 : i32 to vector<3x1x1xi32>
    %5 = arith.cmpi slt, %3, %4 : vector<3x1x1xi32>
    %6 = tpu.iota {dimensions = array<i32: 2>} : vector<1x1x128xi32>
    %c124_i32 = arith.constant 124 : i32
    %7 = vector.broadcast %c124_i32 : i32 to vector<1x1x128xi32>
    %8 = arith.cmpi slt, %6, %7 : vector<1x1x128xi32>
    %9 = vector.broadcast %5 : vector<3x1x1xi1> to vector<3x1x128xi1>
    %10 = vector.broadcast %8 : vector<1x1x128xi1> to vector<3x1x128xi1>
    %11 = arith.andi %9, %10 : vector<3x1x128xi1>
    %c0_i32 = arith.constant 0 : i32
    %c0_i32_0 = arith.constant 0 : i32
    %12 = arith.minsi %c0_i32, %c0_i32_0 : i32
    %c0 = arith.constant 0 : index
    %13 = arith.index_cast %12 : i32 to index
    %c0_1 = arith.constant 0 : index
    %14 = vector.load %arg1[%c0, %13, %c0_1] : memref<3x16x128xf32, #tpu.memory_space<vmem>>, vector<3x12x128xf32>
    %c0_2 = arith.constant 0 : index
    %15 = arith.index_cast %12 : i32 to index
    %c0_3 = arith.constant 0 : index
    %16 = vector.load %arg2[%c0_2, %15, %c0_3] : memref<3x16x128xf32, #tpu.memory_space<vmem>>, vector<3x12x128xf32>
    %17 = arith.subf %14, %16 : vector<3x12x128xf32>
    %c1_i32 = arith.constant 1 : i32
    %18 = arith.addi %12, %c1_i32 : i32
    %c0_4 = arith.constant 0 : index
    %19 = arith.index_cast %18 : i32 to index
    %c0_5 = arith.constant 0 : index
    %20 = vector.load %arg1[%c0_4, %19, %c0_5] : memref<3x16x128xf32, #tpu.memory_space<vmem>>, vector<3x12x128xf32>
    %c1_i32_6 = arith.constant 1 : i32
    %21 = arith.addi %12, %c1_i32_6 : i32
    %c0_7 = arith.constant 0 : index
    %22 = arith.index_cast %21 : i32 to index
    %c0_8 = arith.constant 0 : index
    %23 = vector.load %arg2[%c0_7, %22, %c0_8] : memref<3x16x128xf32, #tpu.memory_space<vmem>>, vector<3x12x128xf32>
    %24 = arith.subf %20, %23 : vector<3x12x128xf32>
    %25 = arith.addf %17, %24 : vector<3x12x128xf32>
    %c2_i32 = arith.constant 2 : i32
    %26 = arith.addi %12, %c2_i32 : i32
    %c0_9 = arith.constant 0 : index
    %27 = arith.index_cast %26 : i32 to index
    %c0_10 = arith.constant 0 : index
    %28 = vector.load %arg1[%c0_9, %27, %c0_10] : memref<3x16x128xf32, #tpu.memory_space<vmem>>, vector<3x12x128xf32>
    %c2_i32_11 = arith.constant 2 : i32
    %29 = arith.addi %12, %c2_i32_11 : i32
    %c0_12 = arith.constant 0 : index
    %30 = arith.index_cast %29 : i32 to index
    %c0_13 = arith.constant 0 : index
    %31 = vector.load %arg2[%c0_12, %30, %c0_13] : memref<3x16x128xf32, #tpu.memory_space<vmem>>, vector<3x12x128xf32>
    %32 = arith.subf %28, %31 : vector<3x12x128xf32>
    %33 = arith.addf %25, %32 : vector<3x12x128xf32>
    %c3_i32_14 = arith.constant 3 : i32
    %34 = arith.addi %12, %c3_i32_14 : i32
    %c0_15 = arith.constant 0 : index
    %35 = arith.index_cast %34 : i32 to index
    %c0_16 = arith.constant 0 : index
    %36 = vector.load %arg1[%c0_15, %35, %c0_16] : memref<3x16x128xf32, #tpu.memory_space<vmem>>, vector<3x12x128xf32>
    %c3_i32_17 = arith.constant 3 : i32
    %37 = arith.addi %12, %c3_i32_17 : i32
    %c0_18 = arith.constant 0 : index
    %38 = arith.index_cast %37 : i32 to index
    %c0_19 = arith.constant 0 : index
    %39 = vector.load %arg2[%c0_18, %38, %c0_19] : memref<3x16x128xf32, #tpu.memory_space<vmem>>, vector<3x12x128xf32>
    %40 = arith.subf %36, %39 : vector<3x12x128xf32>
    %41 = arith.addf %33, %40 : vector<3x12x128xf32>
    %c4_i32 = arith.constant 4 : i32
    %42 = arith.addi %12, %c4_i32 : i32
    %c0_20 = arith.constant 0 : index
    %43 = arith.index_cast %42 : i32 to index
    %c0_21 = arith.constant 0 : index
    %44 = vector.load %arg1[%c0_20, %43, %c0_21] : memref<3x16x128xf32, #tpu.memory_space<vmem>>, vector<3x12x128xf32>
    %c4_i32_22 = arith.constant 4 : i32
    %45 = arith.addi %12, %c4_i32_22 : i32
    %c0_23 = arith.constant 0 : index
    %46 = arith.index_cast %45 : i32 to index
    %c0_24 = arith.constant 0 : index
    %47 = vector.load %arg2[%c0_23, %46, %c0_24] : memref<3x16x128xf32, #tpu.memory_space<vmem>>, vector<3x12x128xf32>
    %48 = arith.subf %44, %47 : vector<3x12x128xf32>
    %49 = arith.addf %41, %48 : vector<3x12x128xf32>
    %c127_i32 = arith.constant 127 : i32
    %50 = tpu.dynamic_rotate %49 by %c127_i32 dim 2 : vector<3x12x128xf32>, i32 -> vector<3x12x128xf32>
    %51 = arith.addf %49, %50 : vector<3x12x128xf32>
    %c126_i32 = arith.constant 126 : i32
    %52 = tpu.dynamic_rotate %49 by %c126_i32 dim 2 : vector<3x12x128xf32>, i32 -> vector<3x12x128xf32>
    %53 = arith.addf %51, %52 : vector<3x12x128xf32>
    %c125_i32 = arith.constant 125 : i32
    %54 = tpu.dynamic_rotate %49 by %c125_i32 dim 2 : vector<3x12x128xf32>, i32 -> vector<3x12x128xf32>
    %55 = arith.addf %53, %54 : vector<3x12x128xf32>
    %c124_i32_25 = arith.constant 124 : i32
    %56 = tpu.dynamic_rotate %49 by %c124_i32_25 dim 2 : vector<3x12x128xf32>, i32 -> vector<3x12x128xf32>
    %57 = arith.addf %55, %56 : vector<3x12x128xf32>
    %58 = tpu.iota {dimensions = array<i32: 1>} : vector<1x12x1xi32>
    %59 = vector.broadcast %12 : i32 to vector<1x12x1xi32>
    %60 = arith.addi %59, %58 : vector<1x12x1xi32>
    %c0_i32_26 = arith.constant 0 : i32
    %61 = vector.broadcast %c0_i32_26 : i32 to vector<1x12x1xi32>
    %62 = arith.cmpi sge, %60, %61 : vector<1x12x1xi32>
    %c0_i32_27 = arith.constant 0 : i32
    %c12_i32 = arith.constant 12 : i32
    %63 = arith.addi %c0_i32_27, %c12_i32 : i32
    %c12_i32_28 = arith.constant 12 : i32
    %64 = arith.minsi %63, %c12_i32_28 : i32
    %65 = vector.broadcast %64 : i32 to vector<1x12x1xi32>
    %66 = arith.cmpi slt, %60, %65 : vector<1x12x1xi32>
    %67 = arith.andi %62, %66 : vector<1x12x1xi1>
    %68 = vector.broadcast %11 : vector<3x1x128xi1> to vector<3x12x128xi1>
    %69 = vector.broadcast %67 : vector<1x12x1xi1> to vector<3x12x128xi1>
    %70 = arith.andi %68, %69 : vector<3x12x128xi1>
    %71 = math.absf %57 : vector<3x12x128xf32>
    %cst = arith.constant 0.000000e+00 : f32
    %72 = vector.broadcast %cst : f32 to vector<3x12x128xf32>
    %73 = arith.select %70, %71, %72 : vector<3x12x128xi1>, vector<3x12x128xf32>
    %74 = vector.shape_cast %73 : vector<3x12x128xf32> to vector<1x3x12x128xf32>
    %cst_29 = arith.constant dense<0.000000e+00> : vector<1xf32>
    %75 = vector.multi_reduction <add>, %74, %cst_29 [1, 2, 3] : vector<1x3x12x128xf32> to vector<1xf32>
    %76 = vector.shape_cast %75 : vector<1xf32> to vector<1x1x1x1xf32>
    %77 = vector.extract %76[0, 0, 0, 0] : f32 from vector<1x1x1x1xf32>
    %78 = vector.broadcast %77 : f32 to vector<1x8x128xf32>
    %c0_30 = arith.constant 0 : index
    %c0_31 = arith.constant 0 : index
    %c0_32 = arith.constant 0 : index
    %79 = vector.load %arg3[%c0_30, %c0_31, %c0_32] : memref<1x8x128xf32, #tpu.memory_space<vmem>>, vector<1x8x128xf32>
    tpu.vector_store %arg3[%c0_30, %c0_31, %c0_32], %78 {strides = array<i32>} : memref<1x8x128xf32, #tpu.memory_space<vmem>>, vector<1x8x128xf32>,
    return
  }
  func.func @transform_0(%arg0: i32) -> (i32, i32, i32) {
    %c0_i32 = arith.constant 0 : i32
    %c0_i32_0 = arith.constant 0 : i32
    %c0_i32_1 = arith.constant 0 : i32
    return %arg0, %c0_i32, %c0_i32_0 : i32, i32, i32
  }
  func.func @transform_1(%arg0: i32) -> (i32, i32, i32) {
    %c0_i32 = arith.constant 0 : i32
    %c0_i32_0 = arith.constant 0 : i32
    %c0_i32_1 = arith.constant 0 : i32
    return %arg0, %c0_i32, %c0_i32_0 : i32, i32, i32
  }
  func.func @transform_2(%arg0: i32) -> (i32, i32, i32) {
    %c0_i32 = arith.constant 0 : i32
    %c0_i32_0 = arith.constant 0 : i32
    %c0_i32_1 = arith.constant 0 : i32
    return %arg0, %c0_i32, %c0_i32_0 : i32, i32, i32
  }
}

</mosaic_0001>

<llo_original>
// kernel: generator_loss_pallas.1
$region0: #{generator_loss_pallas.1}
  #allocation0 [shape = 'u32[]', space=smem, size = 0x4, offset = 0x4, fixed_abs, tag = 'smem constant byte address 0x4 - core index']
  #allocation1 [shape = 'u32[144,128]{1,0:T(1,128)}', space=vmem, size = 0x12000, scoped, tag = 'internal scratch']
  %s0 = inlined_call_operand.hbm [shape: f32[6,16,128], index: 0, kind: input, shape index: {}]
  %s1 = inlined_call_operand.hbm [shape: f32[6,16,128], index: 1, kind: input, shape index: {}]
  %s2 = inlined_call_operand.vmem [shape: f32[2,8,128], index: 2, kind: output, shape index: {}]
  %s3 = sld [smem:[#allocation0]]
  $region49: #{generator_loss_pallas.1} parent=0
    _
  %s5 = ssub.s32 1, %s3
  %s6 = scalar_select 0, %s5, %s3
  $region1: #{generator_loss_pallas.1} parent=0
    #allocation2 [shape = 'u8[49152]{0}', space=vmem, size = 0xc000, scoped, tag = 'input window, operand 0']
    #allocation3 [shape = 's32[2]{0}', space=sflag, size = 0x8, scoped, tag = 'scoped memory for generator_loss_pallas.1']
    #allocation4 [shape = 'u8[49152]{0}', space=vmem, size = 0xc000, scoped, tag = 'input window, operand 1']
    #allocation5 [shape = 's32[2]{0}', space=sflag, size = 0x8, scoped, tag = 'scoped memory for generator_loss_pallas.1']
    %7 = vsyncpa [#allocation3], 0
    %s8 = scalar_lea.sflag [#allocation3], 1
    %9 = vsyncpa %s8, 0
    %10 = vsyncpa [#allocation5], 0
    %s11 = scalar_lea.sflag [#allocation5], 1
    %12 = vsyncpa %s11, 0
    loop: start=0, step=1, limit=4
    $region2: #{generator_loss_pallas.1} parent=1 // loop_pre_header
      _
    $region3: #{generator_loss_pallas.1} parent=1 // loop_header
      %s14 = sphi 0, %s18
      %p15 = scmp.ge.s32.totalorder %s14, 4
      %s24 = sphi 0, %s26
      %s27 = sphi 0, %s24
      %s28 = sphi 0, %s27
      %s44 = sphi 0, %s28
      %s50 = sphi 0, %s52
      %s53 = sphi 0, %s50
      %s54 = sphi 0, %s53
      %s70 = sphi 0, %s54
      %s76 = sphi 0, %s78
      %s79 = sphi 0, %s76
      %s80 = sphi 0, %s79
      %s96 = sphi 0, %s80
    $region4: #{generator_loss_pallas.1} parent=1 // loop_header_branch
      %17 = sbr.rel (%p15) target = $region8
    $region5: #{generator_loss_pallas.1} parent=1 // loop_body
      %s19 = ssub.s32 %s14, 1
      %s20 = ssub.s32 %s14, 2
      %s21 = sadd.s32 %s14, 1
      %s22 = ssub.s32 %s14, %s21
      %p23 = scmp.eq.s32.totalorder %s22, 0
      %s25 = sadd.s32 %s24, 1
      %s26 = scalar_select %p23, %s24, %s25
      %p29 = pneg %p23
      %p30 = scmp.eq.s32.totalorder %s14, 1
      %p31 = por %p29, %p30
      %p32 = scmp.ne.s32.totalorder %s24, %s27
      %p33 = scmp.eq.s32.totalorder %s14, 0
      %p34 = por %p32, %p33
      %p35 = scmp.ne.s32.totalorder %s24, %s27
      %p36 = scmp.eq.s32.totalorder %s19, 1
      %p37 = por %p35, %p36
      %p38 = scmp.ne.s32.totalorder %s27, %s28
      %p39 = scmp.eq.s32.totalorder %s19, 0
      %p40 = por %p38, %p39
      %p41 = scmp.ne.s32.totalorder %s27, %s28
      %p42 = scmp.eq.s32.totalorder %s20, 1
      %p43 = por %p41, %p42
      %p45 = scmp.ne.s32.totalorder %s28, %s44
      %p46 = scmp.eq.s32.totalorder %s20, 0
      %p47 = por %p45, %p46
      %s48 = ssub.s32 %s14, %s21
      %p49 = scmp.eq.s32.totalorder %s48, 0
      %s51 = sadd.s32 %s50, 1
      %s52 = scalar_select %p49, %s50, %s51
      %p55 = pneg %p49
      %p56 = scmp.eq.s32.totalorder %s14, 1
      %p57 = por %p55, %p56
      %p58 = scmp.ne.s32.totalorder %s50, %s53
      %p59 = scmp.eq.s32.totalorder %s14, 0
      %p60 = por %p58, %p59
      %p61 = scmp.ne.s32.totalorder %s50, %s53
      %p62 = scmp.eq.s32.totalorder %s19, 1
      %p63 = por %p61, %p62
      %p64 = scmp.ne.s32.totalorder %s53, %s54
      %p65 = scmp.eq.s32.totalorder %s19, 0
      %p66 = por %p64, %p65
      %p67 = scmp.ne.s32.totalorder %s53, %s54
      %p68 = scmp.eq.s32.totalorder %s20, 1
      %p69 = por %p67, %p68
      %p71 = scmp.ne.s32.totalorder %s54, %s70
      %p72 = scmp.eq.s32.totalorder %s20, 0
      %p73 = por %p71, %p72
      %s74 = ssub.s32 %s14, %s21
      %p75 = scmp.eq.s32.totalorder %s74, 0
      %s77 = sadd.s32 %s76, 1
      %s78 = scalar_select %p75, %s76, %s77
      %p81 = pneg %p75
      %p82 = scmp.eq.s32.totalorder %s14, 1
      %p83 = por %p81, %p82
      %p84 = scmp.ne.s32.totalorder %s76, %s79
      %p85 = scmp.eq.s32.totalorder %s14, 0
      %p86 = por %p84, %p85
      %p87 = scmp.ne.s32.totalorder %s76, %s79
      %p88 = scmp.eq.s32.totalorder %s19, 1
      %p89 = por %p87, %p88
      %p90 = scmp.ne.s32.totalorder %s79, %s80
      %p91 = scmp.eq.s32.totalorder %s19, 0
      %p92 = por %p90, %p91
      %p93 = scmp.ne.s32.totalorder %s79, %s80
      %p94 = scmp.eq.s32.totalorder %s20, 1
      %p95 = por %p93, %p94
      %p97 = scmp.ne.s32.totalorder %s80, %s96
      %p98 = scmp.eq.s32.totalorder %s20, 0
      %p99 = por %p97, %p98
      %p100 = scmp.le.s32.totalorder 1, %s14
      %p101 = scmp.lt.s32.totalorder %s14, 3
      %p102 = pnand %p100, %p101
      %p103 = pneg %p102
      // Predicated region
      $region9: #{generator_loss_pallas.1} parent=5 // pred_check
        _
      $region10: #{generator_loss_pallas.1} parent=5 // pred_check_branch
        %105 = sbr.rel (%p102) target = $region12
      $region11: #{generator_loss_pallas.1} parent=5 // pred_region
        %s106 = ssub.s32 %s14, 1
      $region12: #{generator_loss_pallas.1} parent=5 // pred_fallthru
        _
      %p107 = scmp.lt.s32.totalorder %s14, 2
      // Predicated region
      $region13: #{generator_loss_pallas.1} parent=5 // pred_check
        %p108 = pneg %p107
      $region14: #{generator_loss_pallas.1} parent=5 // pred_check_branch
        %110 = sbr.rel (%p108) target = $region16
      $region15: #{generator_loss_pallas.1} parent=5 // pred_region
        // Predicated region
        $region17: #{generator_loss_pallas.1} parent=15 // pred_check
          %p111 = pneg %p34
        $region18: #{generator_loss_pallas.1} parent=15 // pred_check_branch
          %113 = sbr.rel (%p111) target = $region20
        $region19: #{generator_loss_pallas.1} parent=15 // pred_region
          %s114 = sand.u32 %s24, 1
          %s115 = scalar_lea.sflag [#allocation3], %s114
          %s116 = sand.u32 %s24, 1
          %s117 = smul.addr %s116, 48
          %s118 = scalar_lea.vmem [#allocation2], %s117
          %s119 = smul.u32 3, %s14
          %s121 = ssub.s32 768, 768
          %122 = vsyncadd %s115, %s121
          %s123 = smul.addr %s119, 2
          %s124 = smul.addr %s123, 128
          %s125 = scalar_lea.hbm %s0, %s124
          %s126 = sshll.u32 %s118, 4
          %s127 = int_to_ptr.vmem [resolvable:$true] %s126
          %132 = dma.hbm_to_vmem [thread:$0]  %s125, 768, %s127, %s115, 128, 128, 8
        $region20: #{generator_loss_pallas.1} parent=15 // pred_fallthru
          _
        // Predicated region
        $region21: #{generator_loss_pallas.1} parent=15 // pred_check
          %p133 = pneg %p60
        $region22: #{generator_loss_pallas.1} parent=15 // pred_check_branch
          %135 = sbr.rel (%p133) target = $region24
        $region23: #{generator_loss_pallas.1} parent=15 // pred_region
          %s136 = sand.u32 %s50, 1
          %s137 = scalar_lea.sflag [#allocation5], %s136
          %s138 = sand.u32 %s50, 1
          %s139 = smul.addr %s138, 48
          %s140 = scalar_lea.vmem [#allocation4], %s139
          %s141 = smul.u32 3, %s14
          %s143 = ssub.s32 768, 768
          %144 = vsyncadd %s137, %s143
          %s145 = smul.addr %s141, 2
          %s146 = smul.addr %s145, 128
          %s147 = scalar_lea.hbm %s1, %s146
          %s148 = sshll.u32 %s140, 4
          %s149 = int_to_ptr.vmem [resolvable:$true] %s148
          %154 = dma.hbm_to_vmem [thread:$0]  %s147, 768, %s149, %s137, 128, 128, 8
        $region24: #{generator_loss_pallas.1} parent=15 // pred_fallthru
          _
      $region16: #{generator_loss_pallas.1} parent=5 // pred_fallthru
        _
      %p155 = scmp.le.s32.totalorder 1, %s14
      %p156 = scmp.lt.s32.totalorder %s14, 3
      %p157 = pnand %p155, %p156
      %p158 = pneg %p157
      // Predicated region
      $region25: #{generator_loss_pallas.1} parent=5 // pred_check
        _
      $region26: #{generator_loss_pallas.1} parent=5 // pred_check_branch
        %160 = sbr.rel (%p157) target = $region28
      $region27: #{generator_loss_pallas.1} parent=5 // pred_region
        %s161 = ssub.s32 %s14, 1
        %s162 = sand.u32 %s27, 1
        %s163 = scalar_lea.sflag [#allocation3], %s162
        %s164 = sand.u32 %s27, 1
        %s165 = smul.addr %s164, 48
        %s166 = scalar_lea.vmem [#allocation2], %s165
        // Predicated region
        $region29: #{generator_loss_pallas.1} parent=27 // pred_check
          %p167 = pneg %p40
        $region30: #{generator_loss_pallas.1} parent=27 // pred_check_branch
          %169 = sbr.rel (%p167) target = $region32
        $region31: #{generator_loss_pallas.1} parent=27 // pred_region
          %170 = dma.done %s163, 768
        $region32: #{generator_loss_pallas.1} parent=27 // pred_fallthru
          _
        %s171 = sand.u32 %s53, 1
        %s172 = scalar_lea.sflag [#allocation5], %s171
        %s173 = sand.u32 %s53, 1
        %s174 = smul.addr %s173, 48
        %s175 = scalar_lea.vmem [#allocation4], %s174
        // Predicated region
        $region33: #{generator_loss_pallas.1} parent=27 // pred_check
          %p176 = pneg %p66
        $region34: #{generator_loss_pallas.1} parent=27 // pred_check_branch
          %178 = sbr.rel (%p176) target = $region36
        $region35: #{generator_loss_pallas.1} parent=27 // pred_region
          %179 = dma.done %s172, 768
        $region36: #{generator_loss_pallas.1} parent=27 // pred_fallthru
          _
        %s180 = sand.u32 %s27, 1
        %s181 = scalar_lea.sflag [#allocation3], %s180
        %s182 = sand.u32 %s27, 1
        %s183 = smul.addr %s182, 48
        %s184 = scalar_lea.vmem [#allocation2], %s183
        %p185 = pneg %p40
        %p186 = pneg %p37
        %s187 = sand.u32 %s53, 1
        %s188 = scalar_lea.sflag [#allocation5], %s187
        %s189 = sand.u32 %s53, 1
        %s190 = smul.addr %s189, 48
        %s191 = scalar_lea.vmem [#allocation4], %s190
        %p192 = pneg %p66
        %p193 = pneg %p63
        %p194 = pneg %p92
        %p195 = pneg %p89
        %p196 = scmp.lt.s32.totalorder %s19, 1
        %s197 = scalar_select %p196, %s19, 1
        %s198 = smul.addr %s197, 8
        %s199 = scalar_lea.vmem %s2, %s198
        %s200 = smul.u32 3, %s19
        %s201 = smul.u32 3, %s19
        %p202 = scmp.lt.s32.totalorder %s19, 1
        %s203 = scalar_select %p202, %s19, 1
        %s204 = smul.addr %s203, 8
        %s205 = scalar_lea.vmem %s2, %s204
        %s206 = smul.u32 %s19, 3
        %v207 = vstv %s206
        %v208 = vadd.s32 %v207, 1
        %v209 = vadd.s32 %v207, 2
        %vm210 = vcmp.lt.s32.totalorder %v207, 6
        %vm211 = vcmp.lt.s32.totalorder %v208, 6
        %vm212 = vcmp.lt.s32.totalorder %v209, 6
        %v213 = vlaneseq
        %v214 = vand.u32 %v213, 127
        %vm215 = vcmp.lt.s32.totalorder %v214, 124
        %v216 = vsel %vm210, 1, 0
        %v217 = vsel %vm211, 1, 0
        %v218 = vsel %vm212, 1, 0
        %vm219 = vcmp.eq.s32.totalorder %v216, 1
        %vm220 = vcmp.eq.s32.totalorder %v217, 1
        %vm221 = vcmp.eq.s32.totalorder %v218, 1
        %v222 = vsel %vm215, 1, 0
        %vm223 = vcmp.eq.s32.totalorder %v222, 1
        %vm224 = vmand %vm219, %vm223
        %vm225 = vmand %vm220, %vm223
        %vm226 = vmand %vm221, %vm223
        %v227 = vld [vmem:[%s166] sm:$0xff]
        %v228 = vld [vmem:[%s166 + $0x8] sm:$0xf]
        %v229 = vld [vmem:[%s166 + $0x10] sm:$0xff]
        %v230 = vld [vmem:[%s166 + $0x18] sm:$0xf]
        %v231 = vld [vmem:[%s166 + $0x20] sm:$0xff]
        %v232 = vld [vmem:[%s166 + $0x28] sm:$0xf]
        %v233 = vld [vmem:[%s175] sm:$0xff]
        %v234 = vld [vmem:[%s175 + $0x8] sm:$0xf]
        %v235 = vld [vmem:[%s175 + $0x10] sm:$0xff]
        %v236 = vld [vmem:[%s175 + $0x18] sm:$0xf]
        %v237 = vld [vmem:[%s175 + $0x20] sm:$0xff]
        %v238 = vld [vmem:[%s175 + $0x28] sm:$0xf]
        %v239 = vsub.f32 %v227, %v233
        %v240 = vsub.f32 %v228, %v234
        %v241 = vsub.f32 %v229, %v235
        %v242 = vsub.f32 %v230, %v236
        %v243 = vsub.f32 %v231, %v237
        %v244 = vsub.f32 %v232, %v238
        %v245 = vld [vmem:[%s166 + $0x1] sm:$0xff]
        %v246 = vld [vmem:[%s166 + $0x9] sm:$0xf]
        %v247 = vld [vmem:[%s166 + $0x11] sm:$0xff]
        %v248 = vld [vmem:[%s166 + $0x19] sm:$0xf]
        %v249 = vld [vmem:[%s166 + $0x21] sm:$0xff]
        %v250 = vld [vmem:[%s166 + $0x29] sm:$0xf]
        %v251 = vld [vmem:[%s175 + $0x1] sm:$0xff]
        %v252 = vld [vmem:[%s175 + $0x9] sm:$0xf]
        %v253 = vld [vmem:[%s175 + $0x11] sm:$0xff]
        %v254 = vld [vmem:[%s175 + $0x19] sm:$0xf]
        %v255 = vld [vmem:[%s175 + $0x21] sm:$0xff]
        %v256 = vld [vmem:[%s175 + $0x29] sm:$0xf]
        %v257 = vsub.f32 %v245, %v251
        %v258 = vsub.f32 %v246, %v252
        %v259 = vsub.f32 %v247, %v253
        %v260 = vsub.f32 %v248, %v254
        %v261 = vsub.f32 %v249, %v255
        %v262 = vsub.f32 %v250, %v256
        %v263 = vadd.f32 %v239, %v257
        %v264 = vadd.f32 %v240, %v258
        %v265 = vadd.f32 %v241, %v259
        %v266 = vadd.f32 %v242, %v260
        %v267 = vadd.f32 %v243, %v261
        %v268 = vadd.f32 %v244, %v262
        %v269 = vld [vmem:[%s166 + $0x2] sm:$0xff]
        %v270 = vld [vmem:[%s166 + $0xa] sm:$0xf]
        %v271 = vld [vmem:[%s166 + $0x12] sm:$0xff]
        %v272 = vld [vmem:[%s166 + $0x1a] sm:$0xf]
        %v273 = vld [vmem:[%s166 + $0x22] sm:$0xff]
        %v274 = vld [vmem:[%s166 + $0x2a] sm:$0xf]
        %v275 = vld [vmem:[%s175 + $0x2] sm:$0xff]
        %v276 = vld [vmem:[%s175 + $0xa] sm:$0xf]
        %v277 = vld [vmem:[%s175 + $0x12] sm:$0xff]
        %v278 = vld [vmem:[%s175 + $0x1a] sm:$0xf]
        %v279 = vld [vmem:[%s175 + $0x22] sm:$0xff]
        %v280 = vld [vmem:[%s175 + $0x2a] sm:$0xf]
        %v281 = vsub.f32 %v269, %v275
        %v282 = vsub.f32 %v270, %v276
        %v283 = vsub.f32 %v271, %v277
        %v284 = vsub.f32 %v272, %v278
        %v285 = vsub.f32 %v273, %v279
        %v286 = vsub.f32 %v274, %v280
        %v287 = vadd.f32 %v263, %v281
        %v288 = vadd.f32 %v264, %v282
        %v289 = vadd.f32 %v265, %v283
        %v290 = vadd.f32 %v266, %v284
        %v291 = vadd.f32 %v267, %v285
        %v292 = vadd.f32 %v268, %v286
        %v293 = vld [vmem:[%s166 + $0x3] sm:$0xff]
        %v294 = vld [vmem:[%s166 + $0xb] sm:$0xf]
        %v295 = vld [vmem:[%s166 + $0x13] sm:$0xff]
        %v296 = vld [vmem:[%s166 + $0x1b] sm:$0xf]
        %v297 = vld [vmem:[%s166 + $0x23] sm:$0xff]
        %v298 = vld [vmem:[%s166 + $0x2b] sm:$0xf]
        %v299 = vld [vmem:[%s175 + $0x3] sm:$0xff]
        %v300 = vld [vmem:[%s175 + $0xb] sm:$0xf]
        %v301 = vld [vmem:[%s175 + $0x13] sm:$0xff]
        %v302 = vld [vmem:[%s175 + $0x1b] sm:$0xf]
        %v303 = vld [vmem:[%s175 + $0x23] sm:$0xff]
        %v304 = vld [vmem:[%s175 + $0x2b] sm:$0xf]
        %v305 = vsub.f32 %v293, %v299
        %v306 = vsub.f32 %v294, %v300
        %v307 = vsub.f32 %v295, %v301
        %v308 = vsub.f32 %v296, %v302
        %v309 = vsub.f32 %v297, %v303
        %v310 = vsub.f32 %v298, %v304
        %v311 = vadd.f32 %v287, %v305
        %v312 = vadd.f32 %v288, %v306
        %v313 = vadd.f32 %v289, %v307
        %v314 = vadd.f32 %v290, %v308
        %v315 = vadd.f32 %v291, %v309
        %v316 = vadd.f32 %v292, %v310
        %v317 = vld [vmem:[%s166 + $0x4] sm:$0xff]
        %v318 = vld [vmem:[%s166 + $0xc] sm:$0xf]
        %v319 = vld [vmem:[%s166 + $0x14] sm:$0xff]
        %v320 = vld [vmem:[%s166 + $0x1c] sm:$0xf]
        %v321 = vld [vmem:[%s166 + $0x24] sm:$0xff]
        %v322 = vld [vmem:[%s166 + $0x2c] sm:$0xf]
        %v323 = vld [vmem:[%s175 + $0x4] sm:$0xff]
        %v324 = vld [vmem:[%s175 + $0xc] sm:$0xf]
        %v325 = vld [vmem:[%s175 + $0x14] sm:$0xff]
        %v326 = vld [vmem:[%s175 + $0x1c] sm:$0xf]
        %v327 = vld [vmem:[%s175 + $0x24] sm:$0xff]
        %v328 = vld [vmem:[%s175 + $0x2c] sm:$0xf]
        %v329 = vsub.f32 %v317, %v323
        %v330 = vsub.f32 %v318, %v324
        %v331 = vsub.f32 %v319, %v325
        %v332 = vsub.f32 %v320, %v326
        %v333 = vsub.f32 %v321, %v327
        %v334 = vsub.f32 %v322, %v328
        %v335 = vadd.f32 %v311, %v329
        %v336 = vadd.f32 %v312, %v330
        %v337 = vadd.f32 %v313, %v331
        %v338 = vadd.f32 %v314, %v332
        %v339 = vadd.f32 %v315, %v333
        %v340 = vadd.f32 %v316, %v334
        %341 = vrot.lane.b32.xlu0 %v335, 127
        %v342 = vpop.permute.xlu0 %341
        %343 = vrot.lane.b32.xlu0 %v336, 127
        %v344 = vpop.permute.xlu0 %343
        %345 = vrot.lane.b32.xlu0 %v337, 127
        %v346 = vpop.permute.xlu0 %345
        %347 = vrot.lane.b32.xlu0 %v338, 127
        %v348 = vpop.permute.xlu0 %347
        %349 = vrot.lane.b32.xlu0 %v339, 127
        %v350 = vpop.permute.xlu0 %349
        %351 = vrot.lane.b32.xlu0 %v340, 127
        %v352 = vpop.permute.xlu0 %351
        %v353 = vadd.f32 %v335, %v342
        %v354 = vadd.f32 %v336, %v344
        %v355 = vadd.f32 %v337, %v346
        %v356 = vadd.f32 %v338, %v348
        %v357 = vadd.f32 %v339, %v350
        %v358 = vadd.f32 %v340, %v352
        %359 = vrot.lane.b32.xlu0 %v335, 126
        %v360 = vpop.permute.xlu0 %359
        %361 = vrot.lane.b32.xlu0 %v336, 126
        %v362 = vpop.permute.xlu0 %361
        %363 = vrot.lane.b32.xlu0 %v337, 126
        %v364 = vpop.permute.xlu0 %363
        %365 = vrot.lane.b32.xlu0 %v338, 126
        %v366 = vpop.permute.xlu0 %365
        %367 = vrot.lane.b32.xlu0 %v339, 126
        %v368 = vpop.permute.xlu0 %367
        %369 = vrot.lane.b32.xlu0 %v340, 126
        %v370 = vpop.permute.xlu0 %369
        %v371 = vadd.f32 %v353, %v360
        %v372 = vadd.f32 %v354, %v362
        %v373 = vadd.f32 %v355, %v364
        %v374 = vadd.f32 %v356, %v366
        %v375 = vadd.f32 %v357, %v368
        %v376 = vadd.f32 %v358, %v370
        %377 = vrot.lane.b32.xlu0 %v335, 125
        %v378 = vpop.permute.xlu0 %377
        %379 = vrot.lane.b32.xlu0 %v336, 125
        %v380 = vpop.permute.xlu0 %379
        %381 = vrot.lane.b32.xlu0 %v337, 125
        %v382 = vpop.permute.xlu0 %381
        %383 = vrot.lane.b32.xlu0 %v338, 125
        %v384 = vpop.permute.xlu0 %383
        %385 = vrot.lane.b32.xlu0 %v339, 125
        %v386 = vpop.permute.xlu0 %385
        %387 = vrot.lane.b32.xlu0 %v340, 125
        %v388 = vpop.permute.xlu0 %387
        %v389 = vadd.f32 %v371, %v378
        %v390 = vadd.f32 %v372, %v380
        %v391 = vadd.f32 %v373, %v382
        %v392 = vadd.f32 %v374, %v384
        %v393 = vadd.f32 %v375, %v386
        %v394 = vadd.f32 %v376, %v388
        %395 = vrot.lane.b32.xlu0 %v335, 124
        %v396 = vpop.permute.xlu0 %395
        %397 = vrot.lane.b32.xlu0 %v336, 124
        %v398 = vpop.permute.xlu0 %397
        %399 = vrot.lane.b32.xlu0 %v337, 124
        %v400 = vpop.permute.xlu0 %399
        %401 = vrot.lane.b32.xlu0 %v338, 124
        %v402 = vpop.permute.xlu0 %401
        %403 = vrot.lane.b32.xlu0 %v339, 124
        %v404 = vpop.permute.xlu0 %403
        %405 = vrot.lane.b32.xlu0 %v340, 124
        %v406 = vpop.permute.xlu0 %405
        %v407 = vadd.f32 %v389, %v396
        %v408 = vadd.f32 %v390, %v398
        %v409 = vadd.f32 %v391, %v400
        %v410 = vadd.f32 %v392, %v402
        %v411 = vadd.f32 %v393, %v404
        %v412 = vadd.f32 %v394, %v406
        %v413 = vlaneseq
        %v414 = vshrl.u32 %v413, 7
        %v415 = vadd.s32 %v414, 8
        %vm416 = vcmp.ge.s32.totalorder %v414, 0
        %vm417 = vcmp.ge.s32.totalorder %v415, 0
        %vm418 = vcmp.lt.s32.totalorder %v414, 12
        %vm419 = vcmp.lt.s32.totalorder %v415, 12
        %vm420 = vmand %vm416, %vm418
        %vm421 = vmand %vm417, %vm419
        %v422 = vsel %vm224, 1, 0
        %v423 = vsel %vm225, 1, 0
        %v424 = vsel %vm226, 1, 0
        %vm425 = vcmp.eq.s32.totalorder %v422, 1
        %vm426 = vcmp.eq.s32.totalorder %v423, 1
        %vm427 = vcmp.eq.s32.totalorder %v424, 1
        %v428 = vsel %vm420, 1, 0
        %v429 = vsel %vm421, 1, 0
        %vm430 = vcmp.eq.s32.totalorder %v428, 1
        %vm431 = vcmp.eq.s32.totalorder %v429, 1
        %vm432 = vmand %vm425, %vm430
        %vm433 = vmand %vm425, %vm431
        %vm434 = vmand %vm426, %vm430
        %vm435 = vmand %vm426, %vm431
        %vm436 = vmand %vm427, %vm430
        %vm437 = vmand %vm427, %vm431
        %v438 = vand.u32 2147483647, %v407
        %v439 = vand.u32 2147483647, %v408
        %v440 = vand.u32 2147483647, %v409
        %v441 = vand.u32 2147483647, %v410
        %v442 = vand.u32 2147483647, %v411
        %v443 = vand.u32 2147483647, %v412
        %v444 = vsel %vm432, %v438, 0.0
        %v445 = vsel %vm433, %v439, 0.0
        %v446 = vsel %vm434, %v440, 0.0
        %v447 = vsel %vm435, %v441, 0.0
        %v448 = vsel %vm436, %v442, 0.0
        %v449 = vsel %vm437, %v443, 0.0
        %vm450 = vcmask 1043456
        %v451 = vsel %vm450, %v445, 0.0
        %v452 = vadd.f32 %v444, %v451
        %v453 = vadd.f32 %v452, %v446
        %v454 = vsel %vm450, %v447, 0.0
        %v455 = vadd.f32 %v453, %v454
        %v456 = vadd.f32 %v455, %v448
        %v457 = vsel %vm450, %v449, 0.0
        %v458 = vadd.f32 %v456, %v457
        %459 = vadd.xlane.f32.xlu0 %v458
        %v460 = vpop.xlane.xlu0 %459
        %v461 = vrot.slane %v460, 4
        %v462 = vadd.f32 %v460, %v461
        %v463 = vrot.slane %v462, 2
        %v464 = vadd.f32 %v462, %v463
        %v465 = vrot.slane %v464, 1
        %v466 = vadd.f32 %v464, %v465
        %s467 = vtos %v466
        %v468 = vstv %s467
        %469 = vst [vmem:[%s205] sm:$0xff] %v468
        %p470 = scmp.lt.s32.totalorder %s19, 1
        %s471 = scalar_select %p470, %s19, 1
        %s472 = smul.addr %s471, 8
        %s473 = scalar_lea.vmem %s2, %s472
        // Predicated region
        $region37: #{generator_loss_pallas.1} parent=27 // pred_check
          %p474 = pneg %p89
        $region38: #{generator_loss_pallas.1} parent=27 // pred_check_branch
          %476 = sbr.rel (%p474) target = $region40
        $region39: #{generator_loss_pallas.1} parent=27 // pred_region
          _
        $region40: #{generator_loss_pallas.1} parent=27 // pred_fallthru
          _
      $region28: #{generator_loss_pallas.1} parent=5 // pred_fallthru
        _
      %p477 = scmp.le.s32.totalorder 2, %s14
      // Predicated region
      $region41: #{generator_loss_pallas.1} parent=5 // pred_check
        %p478 = pneg %p477
      $region42: #{generator_loss_pallas.1} parent=5 // pred_check_branch
        %480 = sbr.rel (%p478) target = $region44
      $region43: #{generator_loss_pallas.1} parent=5 // pred_region
        %s481 = ssub.s32 %s14, 2
        // Predicated region
        $region45: #{generator_loss_pallas.1} parent=43 // pred_check
          %p482 = pneg %p95
        $region46: #{generator_loss_pallas.1} parent=43 // pred_check_branch
          %484 = sbr.rel (%p482) target = $region48
        $region47: #{generator_loss_pallas.1} parent=43 // pred_region
          %p485 = scmp.lt.s32.totalorder %s20, 1
          %s486 = scalar_select %p485, %s20, 1
          %s487 = smul.addr %s486, 8
          %s488 = scalar_lea.vmem %s2, %s487
        $region48: #{generator_loss_pallas.1} parent=43 // pred_fallthru
          _
      $region44: #{generator_loss_pallas.1} parent=5 // pred_fallthru
        _
    $region6: #{generator_loss_pallas.1} parent=1 // loop_footer
      %s18 = sadd.s32 1, %s14
    $region7: #{generator_loss_pallas.1} parent=1 // loop_footer_branch
      %13 = sbr.rel target = $region3
    $region8: #{generator_loss_pallas.1} parent=1 // loop_exit
      _
    %489 = vsyncpa [#allocation3], 1
    %s490 = scalar_lea.sflag [#allocation3], 1
    %491 = vsyncpa %s490, 1
    %492 = vsyncpa [#allocation5], 1
    %s493 = scalar_lea.sflag [#allocation5], 1
    %494 = vsyncpa %s493, 1

</llo_original>
